<compile_context>
chip_gen: v7x
topology: tpu7x:2x2x1
jax: 0.10.0
libtpu: 0.0.40
codegen_flags: <defaults>
</compile_context>

<pallas_src>
import functools

import jax
import jax.numpy as jnp
from jax import lax
from jax.experimental import pallas as pl
from jax.experimental.pallas import tpu as pltpu


def _round_up(x, m):
    return (x + m - 1) // m * m


# ----------------------------------------------------------------------------
# Retina foveation (glue: data-dependent dynamic slicing + small avg pools).
# ----------------------------------------------------------------------------
def retina_foveate(x, l, *, g, k, s):
    """Extract k progressively larger patches around l, pool to (g, g),
    concat along channels and flatten.  x: (B, C, H, W), l: (B, 2) in [-1, 1].
    Returns phi: (B, k*C*g*g) float32."""
    B, C, H, W = x.shape

    # denormalize: (0.5 * ((l + 1) * H)).long(); loop-invariant, hoisted.
    # NOTE: uses H for both coordinates to exactly match the PyTorch module
    # (which passes H only); identical for square images.
    start = (0.5 * ((l + 1.0) * H)).astype(jnp.int32)  # (B, 2), [x, y]

    # Patch sizes exactly as PyTorch: size = g; size = int(s * size) each step.
    sizes = []
    size = g
    for _ in range(k):
        sizes.append(size)
        size = int(s * size)

    # Pad once with the maximum pad; per-scale slices use adjusted offsets.
    max_pad = sizes[-1] // 2
    xp = jnp.pad(x, ((0, 0), (0, 0), (max_pad, max_pad), (max_pad, max_pad)))

    patches = []
    for sz in sizes:
        pad = sz // 2
        off = max_pad - pad  # per-scale padded coord -> once-padded coord

        def extract_one(xi, si, _sz=sz, _c=C, _off=off):
            # PyTorch: x_padded[i, :, start_y:end_y, start_x:end_x]
            return lax.dynamic_slice(
                xi, (0, si[1] + _off, si[0] + _off), (_c, _sz, _sz))

        patch = jax.vmap(extract_one)(xp, start)  # (B, C, sz, sz)
        # avg_pool2d with kernel sz//g -> (B, C, g, g)
        kk = sz // g
        patch = patch.reshape(B, C, g, kk, g, kk).mean(axis=(3, 5))
        patches.append(patch)

    phi = jnp.concatenate(patches, axis=1)  # (B, k*C, g, g)
    return phi.reshape(B, -1)               # (B, k*C*g*g)


# ----------------------------------------------------------------------------
# Pallas kernel: g_t = relu( relu(X @ W12 + b12) @ W34 + b34 )
#   X   = [phi | l | 0-pad]                 (tile_b, K12_pad)
#   W12 = blockdiag(w1, w2), 0-padded       (K12_pad, N_pad)
#   W34 = [w3; w4; 0], 0-padded             (N_pad,  N_pad)
#   b12 = [b1 | b2 | 0], b34 = [b3+b4 | 0]  (1, N_pad)
# Zero padding contributes exactly zero; real output columns sliced in JAX.
# ----------------------------------------------------------------------------
def glimpse_kernel(x_ref, w12_ref, b12_ref, w34_ref, b34_ref, out_ref):
    h = jnp.dot(x_ref[...], w12_ref[...],
                preferred_element_type=jnp.float32) + b12_ref[...]
    h = jnp.maximum(h, 0.0)
    y = jnp.dot(h, w34_ref[...],
                preferred_element_type=jnp.float32) + b34_ref[...]
    out_ref[...] = jnp.maximum(y, 0.0)


def pack_glimpse_params(params, *, h_g, h_l):
    """Fuse the 4 Linear layers into 2 lane-dense matmuls (done once)."""
    w1, b1 = params["w1"], params["b1"]  # (D_phi, h_g), (1, h_g)
    w2, b2 = params["w2"], params["b2"]  # (2, h_l),     (1, h_l)
    w3, b3 = params["w3"], params["b3"]  # (h_g, n_out), (1, n_out)
    w4, b4 = params["w4"], params["b4"]  # (h_l, n_out), (1, n_out)

    d_phi = w1.shape[0]
    n_out = h_g + h_l
    k12_pad = _round_up(d_phi + 2, 128)
    n_pad = _round_up(n_out, 128)

    w12 = jnp.zeros((k12_pad, n_pad), jnp.float32)
    w12 = w12.at[:d_phi, :h_g].set(w1)
    w12 = w12.at[d_phi:d_phi + 2, h_g:h_g + h_l].set(w2)
    b12 = jnp.zeros((1, n_pad), jnp.float32)
    b12 = b12.at[:, :h_g].set(b1)
    b12 = b12.at[:, h_g:h_g + h_l].set(b2)

    w34 = jnp.zeros((n_pad, n_pad), jnp.float32)
    w34 = w34.at[:h_g, :n_out].set(w3)
    w34 = w34.at[h_g:h_g + h_l, :n_out].set(w4)
    b34 = jnp.zeros((1, n_pad), jnp.float32)
    b34 = b34.at[:, :n_out].set(b3 + b4)

    return {"w12": w12, "b12": b12, "w34": w34, "b34": b34}


def glimpse_fc_pallas(phi, l, packed, *, n_out):
    """phi: (B, D_phi), l: (B, 2), packed: fused/padded weights."""
    B, d_phi = phi.shape
    w12, b12 = packed["w12"], packed["b12"]
    w34, b34 = packed["w34"], packed["b34"]
    k12_pad = w12.shape[0]
    n_pad = w12.shape[1]

    # Pad batch (sublanes) to a multiple of 8 and tile it with a parallel grid
    # axis (uses both v7x TensorCores at large B; grid=(1,) at toy B).
    b_pad = _round_up(B, 8)
    tile_b = min(b_pad, 128)
    b_pad = _round_up(b_pad, tile_b)
    grid = (b_pad // tile_b,)

    # Lane-dense fused input [phi | l | 0].
    x12 = jnp.zeros((b_pad, k12_pad), jnp.float32)
    x12 = x12.at[:B, :d_phi].set(phi)
    x12 = x12.at[:B, d_phi:d_phi + 2].set(l)

    out = pl.pallas_call(
        glimpse_kernel,
        out_shape=jax.ShapeDtypeStruct((b_pad, n_pad), jnp.float32),
        grid_spec=pltpu.PrefetchScalarGridSpec(
            num_scalar_prefetch=0,
            grid=grid,
            in_specs=[
                pl.BlockSpec((tile_b, k12_pad), lambda i: (i, 0)),
                pl.BlockSpec((k12_pad, n_pad), lambda i: (0, 0)),
                pl.BlockSpec((1, n_pad), lambda i: (0, 0)),
                pl.BlockSpec((n_pad, n_pad), lambda i: (0, 0)),
                pl.BlockSpec((1, n_pad), lambda i: (0, 0)),
            ],
            out_specs=pl.BlockSpec((tile_b, n_pad), lambda i: (i, 0)),
        ),
        compiler_params=pltpu.CompilerParams(
            dimension_semantics=("parallel",)),
    )(x12, w12, b12, w34, b34)

    return out[:B, :n_out]


# ----------------------------------------------------------------------------
# Full forward (retina glue in JAX + fused Pallas FC stack).
# ----------------------------------------------------------------------------
def glimpse_network_forward(x, l_t_prev, packed, *, g, k, s, n_out):
    phi = retina_foveate(x, l_t_prev, g=g, k=k, s=s)
    return glimpse_fc_pallas(phi, l_t_prev, packed, n_out=n_out)


# Pure-JAX reference of the FC stack (unfused, for a correctness check).
def _fc_ref(phi, l, p):
    h_phi = jax.nn.relu(phi @ p["w1"] + p["b1"])
    h_l = jax.nn.relu(l @ p["w2"] + p["b2"])
    return jax.nn.relu(h_phi @ p["w3"] + p["b3"] + h_l @ p["w4"] + p["b4"])


def init_params(key, *, h_g, h_l, g, k, c):
    """Deterministic synthetic init, PyTorch-Linear-style uniform(-1/sqrt(fan_in), ...).
    Weights stored as (in, out); biases as (1, out)."""
    d_phi = k * g * g * c
    dims = [("w1", d_phi, h_g), ("w2", 2, h_l),
            ("w3", h_g, h_g + h_l), ("w4", h_l, h_g + h_l)]
    params = {}
    for name, d_in, d_out in dims:
        key, kw, kb = jax.random.split(key, 3)
        bound = 1.0 / (d_in ** 0.5)
        params[name] = jax.random.uniform(kw, (d_in, d_out), jnp.float32,
                                          minval=-bound, maxval=bound)
        params["b" + name[1:]] = jax.random.uniform(kb, (1, d_out), jnp.float32,
                                                    minval=-bound, maxval=bound)
    return params


if __name__ == "__main__":
    # Small shapes consistent with the module.
    B, C, H, W = 2, 3, 16, 16
    g_patch, k_patches, s_scale = 4, 2, 2
    h_g, h_l = 32, 16
    n_out = h_g + h_l

    key = jax.random.PRNGKey(0)
    kx, kl, kp = jax.random.split(key, 3)
    x = jax.random.normal(kx, (B, C, H, W), jnp.float32)
    l_t_prev = jax.random.uniform(kl, (B, 2), jnp.float32, minval=-1.0, maxval=1.0)
    params = init_params(kp, h_g=h_g, h_l=h_l, g=g_patch, k=k_patches, c=C)

    # Pack/fuse weights once, outside jit and outside the kernel.
    packed = pack_glimpse_params(params, h_g=h_g, h_l=h_l)

    fwd = jax.jit(functools.partial(glimpse_network_forward,
                                    g=g_patch, k=k_patches, s=s_scale,
                                    n_out=n_out))
    g_t = jax.block_until_ready(fwd(x, l_t_prev, packed))

    # Sanity check: fused Pallas FC stack vs unfused pure-JAX reference.
    phi_ref = retina_foveate(x, l_t_prev, g=g_patch, k=k_patches, s=s_scale)
    ref = _fc_ref(phi_ref, l_t_prev, params)
    assert g_t.shape == (B, n_out)
    assert jnp.allclose(g_t, ref, atol=1e-4, rtol=1e-4), \
        float(jnp.max(jnp.abs(g_t - ref)))

    print("KERNEL_OK")
</pallas_src>

<mosaic_0001>
module attributes {stable_mosaic.version = 11 : i64} {
  func.func @glimpse_kernel(%arg0: i32, %arg1: memref<8x128xf32, #tpu.memory_space<vmem>>, %arg2: memref<128x128xf32, #tpu.memory_space<vmem>>, %arg3: memref<1x128xf32, #tpu.memory_space<vmem>>, %arg4: memref<128x128xf32, #tpu.memory_space<vmem>>, %arg5: memref<1x128xf32, #tpu.memory_space<vmem>>, %arg6: memref<8x128xf32, #tpu.memory_space<vmem>>) attributes {dimension_semantics = [#tpu.dimension_semantics<parallel>], iteration_bounds = array<i64: 1>, scalar_prefetch = 0 : i64, scratch_operands = 0 : i64, tpu.core_type = #tpu.core_type<tc>, window_params = [{transform_indices = @transform_0, window_bounds = array<i64: 8, 128>}, {pipeline_mode = #tpu.pipeline_mode<synchronous>, transform_indices = @transform_1, window_bounds = array<i64: 128, 128>}, {pipeline_mode = #tpu.pipeline_mode<synchronous>, transform_indices = @transform_2, window_bounds = array<i64: 1, 128>}, {pipeline_mode = #tpu.pipeline_mode<synchronous>, transform_indices = @transform_3, window_bounds = array<i64: 128, 128>}, {pipeline_mode = #tpu.pipeline_mode<synchronous>, transform_indices = @transform_4, window_bounds = array<i64: 1, 128>}, {transform_indices = @transform_5, window_bounds = array<i64: 8, 128>}]} {
    %c0 = arith.constant 0 : index
    %c0_0 = arith.constant 0 : index
    %0 = vector.load %arg1[%c0, %c0_0] : memref<8x128xf32, #tpu.memory_space<vmem>>, vector<8x128xf32>
    %c0_1 = arith.constant 0 : index
    %c0_2 = arith.constant 0 : index
    %1 = vector.load %arg2[%c0_1, %c0_2] : memref<128x128xf32, #tpu.memory_space<vmem>>, vector<128x128xf32>
    %cst = arith.constant dense<0.000000e+00> : vector<8x128xf32>
    %2 = tpu.matmul %0, %1, %cst {dimension_numbers = #tpu.dot_dimension_numbers<[1], [0], [0], [1], [0, 0, 1, 1], [], []>} : vector<8x128xf32>, vector<128x128xf32>, vector<8x128xf32> -> vector<8x128xf32>
    %c0_3 = arith.constant 0 : index
    %c0_4 = arith.constant 0 : index
    %3 = vector.load %arg3[%c0_3, %c0_4] : memref<1x128xf32, #tpu.memory_space<vmem>>, vector<1x128xf32>
    %4 = vector.broadcast %3 : vector<1x128xf32> to vector<8x128xf32>
    %5 = arith.addf %2, %4 : vector<8x128xf32>
    %cst_5 = arith.constant 0.000000e+00 : f32
    %6 = vector.broadcast %cst_5 : f32 to vector<8x128xf32>
    %7 = arith.maximumf %5, %6 : vector<8x128xf32>
    %c0_6 = arith.constant 0 : index
    %c0_7 = arith.constant 0 : index
    %8 = vector.load %arg4[%c0_6, %c0_7] : memref<128x128xf32, #tpu.memory_space<vmem>>, vector<128x128xf32>
    %cst_8 = arith.constant dense<0.000000e+00> : vector<8x128xf32>
    %9 = tpu.matmul %7, %8, %cst_8 {dimension_numbers = #tpu.dot_dimension_numbers<[1], [0], [0], [1], [0, 0, 1, 1], [], []>} : vector<8x128xf32>, vector<128x128xf32>, vector<8x128xf32> -> vector<8x128xf32>
    %c0_9 = arith.constant 0 : index
    %c0_10 = arith.constant 0 : index
    %10 = vector.load %arg5[%c0_9, %c0_10] : memref<1x128xf32, #tpu.memory_space<vmem>>, vector<1x128xf32>
    %11 = vector.broadcast %10 : vector<1x128xf32> to vector<8x128xf32>
    %12 = arith.addf %9, %11 : vector<8x128xf32>
    %cst_11 = arith.constant 0.000000e+00 : f32
    %13 = vector.broadcast %cst_11 : f32 to vector<8x128xf32>
    %14 = arith.maximumf %12, %13 : vector<8x128xf32>
    %c0_12 = arith.constant 0 : index
    %c0_13 = arith.constant 0 : index
    %15 = vector.load %arg6[%c0_12, %c0_13] : memref<8x128xf32, #tpu.memory_space<vmem>>, vector<8x128xf32>
    tpu.vector_store %arg6[%c0_12, %c0_13], %14 {strides = array<i32>} : memref<8x128xf32, #tpu.memory_space<vmem>>, vector<8x128xf32>,
    return
  }
  func.func @transform_0(%arg0: i32) -> (i32, i32) {
    %c0_i32 = arith.constant 0 : i32
    %c0_i32_0 = arith.constant 0 : i32
    return %arg0, %c0_i32 : i32, i32
  }
  func.func @transform_1(%arg0: i32) -> (i32, i32) {
    %c0_i32 = arith.constant 0 : i32
    %c0_i32_0 = arith.constant 0 : i32
    %c0_i32_1 = arith.constant 0 : i32
    return %c0_i32, %c0_i32_0 : i32, i32
  }
  func.func @transform_2(%arg0: i32) -> (i32, i32) {
    %c0_i32 = arith.constant 0 : i32
    %c0_i32_0 = arith.constant 0 : i32
    %c0_i32_1 = arith.constant 0 : i32
    return %c0_i32, %c0_i32_0 : i32, i32
  }
  func.func @transform_3(%arg0: i32) -> (i32, i32) {
    %c0_i32 = arith.constant 0 : i32
    %c0_i32_0 = arith.constant 0 : i32
    %c0_i32_1 = arith.constant 0 : i32
    return %c0_i32, %c0_i32_0 : i32, i32
  }
  func.func @transform_4(%arg0: i32) -> (i32, i32) {
    %c0_i32 = arith.constant 0 : i32
    %c0_i32_0 = arith.constant 0 : i32
    %c0_i32_1 = arith.constant 0 : i32
    return %c0_i32, %c0_i32_0 : i32, i32
  }
  func.func @transform_5(%arg0: i32) -> (i32, i32) {
    %c0_i32 = arith.constant 0 : i32
    %c0_i32_0 = arith.constant 0 : i32
    return %arg0, %c0_i32 : i32, i32
  }
}

</mosaic_0001>

<llo_original>
// kernel: glimpse_network_forward.1
$region0: #{glimpse_network_forward.1}
  #allocation0 [shape = 'u32[]', space=smem, size = 0x4, offset = 0x4, fixed_abs, tag = 'smem constant byte address 0x4 - core index']
  #allocation1 [shape = 'u32[144,128]{1,0:T(1,128)}', space=vmem, size = 0x12000, scoped, tag = 'internal scratch']
  %s0 = inlined_call_operand.vmem [shape: f32[8,128], index: 0, kind: input, shape index: {}]
  %s1 = inlined_call_operand.vmem [shape: f32[128,128], index: 1, kind: input, shape index: {}]
  %s2 = inlined_call_operand.vmem [shape: f32[1,128], index: 2, kind: input, shape index: {}]
  %s3 = inlined_call_operand.vmem [shape: f32[128,128], index: 3, kind: input, shape index: {}]
  %s4 = inlined_call_operand.vmem [shape: f32[1,128], index: 4, kind: input, shape index: {}]
  %s5 = inlined_call_operand.vmem [shape: f32[8,128], index: 5, kind: output, shape index: {}]
  %s6 = sld [smem:[#allocation0]]
  $region30: #{glimpse_network_forward.1} parent=0
    _
  %s8 = ssub.s32 1, %s6
  %s9 = scalar_select 0, %s8, %s6
  // Predicated region
  $region2: #{glimpse_network_forward.1} parent=0 // pred_check
    _
  $region3: #{glimpse_network_forward.1} parent=0 // pred_check_branch
    %11 = sbr.rel (0) target = $region5
  $region4: #{glimpse_network_forward.1} parent=0 // pred_region
    _
  $region5: #{glimpse_network_forward.1} parent=0 // pred_fallthru
    _
  // Predicated region
  $region6: #{glimpse_network_forward.1} parent=0 // pred_check
    _
  $region7: #{glimpse_network_forward.1} parent=0 // pred_check_branch
    %13 = sbr.rel (0) target = $region9
  $region8: #{glimpse_network_forward.1} parent=0 // pred_region
    _
  $region9: #{glimpse_network_forward.1} parent=0 // pred_fallthru
    _
  // Predicated region
  $region10: #{glimpse_network_forward.1} parent=0 // pred_check
    _
  $region11: #{glimpse_network_forward.1} parent=0 // pred_check_branch
    %15 = sbr.rel (0) target = $region13
  $region12: #{glimpse_network_forward.1} parent=0 // pred_region
    _
  $region13: #{glimpse_network_forward.1} parent=0 // pred_fallthru
    _
  // Predicated region
  $region14: #{glimpse_network_forward.1} parent=0 // pred_check
    _
  $region15: #{glimpse_network_forward.1} parent=0 // pred_check_branch
    %17 = sbr.rel (0) target = $region17
  $region16: #{glimpse_network_forward.1} parent=0 // pred_region
    _
  $region17: #{glimpse_network_forward.1} parent=0 // pred_fallthru
    _
  // Predicated region
  $region18: #{glimpse_network_forward.1} parent=0 // pred_check
    _
  $region19: #{glimpse_network_forward.1} parent=0 // pred_check_branch
    %19 = sbr.rel (0) target = $region21
  $region20: #{glimpse_network_forward.1} parent=0 // pred_region
    _
  $region21: #{glimpse_network_forward.1} parent=0 // pred_fallthru
    _
  %v20 = vld [vmem:[%s0] sm:$0xff]
  %v21 = vld [vmem:[%s1] sm:$0xff]
  %v22 = vld [vmem:[%s1 + $0x8] sm:$0xff]
  %v23 = vld [vmem:[%s1 + $0x10] sm:$0xff]
  %v24 = vld [vmem:[%s1 + $0x18] sm:$0xff]
  %v25 = vld [vmem:[%s1 + $0x20] sm:$0xff]
  %v26 = vld [vmem:[%s1 + $0x28] sm:$0xff]
  %v27 = vld [vmem:[%s1 + $0x30] sm:$0xff]
  %v28 = vld [vmem:[%s1 + $0x38] sm:$0xff]
  %v29 = vld [vmem:[%s1 + $0x40] sm:$0xff]
  %v30 = vld [vmem:[%s1 + $0x48] sm:$0xff]
  %v31 = vld [vmem:[%s1 + $0x50] sm:$0xff]
  %v32 = vld [vmem:[%s1 + $0x58] sm:$0xff]
  %v33 = vld [vmem:[%s1 + $0x60] sm:$0xff]
  %v34 = vld [vmem:[%s1 + $0x68] sm:$0xff]
  %v35 = vld [vmem:[%s1 + $0x70] sm:$0xff]
  %v36 = vld [vmem:[%s1 + $0x78] sm:$0xff]
  %v37 = vld [vmem:[%s2] sm:$0x1]
  %v39 = vlaneseq
  %v40 = vshrl.u32 %v39, 7
  %v41 = vsub.s32 0, %v40
  %v42 = vrot.slane %v37, %v41
  %44 = vmatprep.subr.mxu0 0.0
  %45 = vmatpush1.msra.mxu0 %v21
  %46 = vmatprep.subr.mxu0 0.0
  %47 = vmatpush1.msra.mxu0 %v22
  %48 = vmatprep.subr.mxu0 0.0
  %49 = vmatpush1.msra.mxu0 %v23
  %50 = vmatprep.subr.mxu0 0.0
  %51 = vmatpush1.msra.mxu0 %v24
  %52 = vmatprep.subr.mxu0 0.0
  %53 = vmatpush1.msra.mxu0 %v25
  %54 = vmatprep.subr.mxu0 0.0
  %55 = vmatpush1.msra.mxu0 %v26
  %56 = vmatprep.subr.mxu0 0.0
  %57 = vmatpush1.msra.mxu0 %v27
  %58 = vmatprep.subr.mxu0 0.0
  %59 = vmatpush1.msra.mxu0 %v28
  %60 = vmatprep.subr.mxu0 0.0
  %61 = vmatpush1.msra.mxu0 %v29
  %62 = vmatprep.subr.mxu0 0.0
  %63 = vmatpush1.msra.mxu0 %v30
  %64 = vmatprep.subr.mxu0 0.0
  %65 = vmatpush1.msra.mxu0 %v31
  %66 = vmatprep.subr.mxu0 0.0
  %67 = vmatpush1.msra.mxu0 %v32
  %68 = vmatprep.subr.mxu0 0.0
  %69 = vmatpush1.msra.mxu0 %v33
  %70 = vmatprep.subr.mxu0 0.0
  %71 = vmatpush1.msra.mxu0 %v34
  %72 = vmatprep.subr.mxu0 0.0
  %73 = vmatpush1.msra.mxu0 %v35
  %74 = vmatprep.subr.mxu0 0.0
  %75 = vmatpush1.msra.mxu0 %v36
  %76 = vmatprep.subr.mxu0 0.0
  %77 = vmatpush1.msra.mxu0 0.0
  %78 = vmatprep.subr.mxu0 0.0
  %79 = vmatpush1.msra.mxu0 0.0
  %80 = vmatprep.subr.mxu0 0.0
  %81 = vmatpush1.msra.mxu0 0.0
  %82 = vmatprep.subr.mxu0 0.0
  %83 = vmatpush1.msra.mxu0 0.0
  %84 = vmatprep.subr.mxu0 0.0
  %85 = vmatpush1.msra.mxu0 0.0
  %86 = vmatprep.subr.mxu0 0.0
  %87 = vmatpush1.msra.mxu0 0.0
  %88 = vmatprep.subr.mxu0 0.0
  %89 = vmatpush1.msra.mxu0 0.0
  %90 = vmatprep.subr.mxu0 0.0
  %91 = vmatpush1.msra.mxu0 0.0
  %92 = vmatprep.subr.mxu0 0.0
  %93 = vmatpush1.msra.mxu0 0.0
  %94 = vmatprep.subr.mxu0 0.0
  %95 = vmatpush1.msra.mxu0 0.0
  %96 = vmatprep.subr.mxu0 0.0
  %97 = vmatpush1.msra.mxu0 0.0
  %98 = vmatprep.subr.mxu0 0.0
  %99 = vmatpush1.msra.mxu0 0.0
  %100 = vmatprep.subr.mxu0 0.0
  %101 = vmatpush1.msra.mxu0 0.0
  %102 = vmatprep.subr.mxu0 0.0
  %103 = vmatpush1.msra.mxu0 0.0
  %104 = vmatprep.subr.mxu0 0.0
  %105 = vmatpush1.msra.mxu0 0.0
  %106 = vmatprep.subr.mxu0 0.0
  %107 = vmatpush1.msra.mxu0 0.0
  %108 = vmatprep.mubr.f32.mxu0 0.0
  %109 = vmatmul.mubr.f32.gmra.mrb[0].mxu0 %v20
  %v110 = vpop.f32.mrb[0].mxu0
  %v111 = vadd.f32 %v42, %v110
  %v112 = vpop.f32.mrb[0].mxu0
  %113 = vdwg.mxu0
  %v114 = vmax.f32 %v111, 0.0
  %v115 = vld [vmem:[%s3] sm:$0xff]
  %v116 = vld [vmem:[%s3 + $0x8] sm:$0xff]
  %v117 = vld [vmem:[%s3 + $0x10] sm:$0xff]
  %v118 = vld [vmem:[%s3 + $0x18] sm:$0xff]
  %v119 = vld [vmem:[%s3 + $0x20] sm:$0xff]
  %v120 = vld [vmem:[%s3 + $0x28] sm:$0xff]
  %v121 = vld [vmem:[%s3 + $0x30] sm:$0xff]
  %v122 = vld [vmem:[%s3 + $0x38] sm:$0xff]
  %v123 = vld [vmem:[%s3 + $0x40] sm:$0xff]
  %v124 = vld [vmem:[%s3 + $0x48] sm:$0xff]
  %v125 = vld [vmem:[%s3 + $0x50] sm:$0xff]
  %v126 = vld [vmem:[%s3 + $0x58] sm:$0xff]
  %v127 = vld [vmem:[%s3 + $0x60] sm:$0xff]
  %v128 = vld [vmem:[%s3 + $0x68] sm:$0xff]
  %v129 = vld [vmem:[%s3 + $0x70] sm:$0xff]
  %v130 = vld [vmem:[%s3 + $0x78] sm:$0xff]
  %v131 = vld [vmem:[%s4] sm:$0x1]
  %v133 = vlaneseq
  %v134 = vshrl.u32 %v133, 7
  %v135 = vsub.s32 0, %v134
  %v136 = vrot.slane %v131, %v135
  %138 = vmatprep.subr.mxu0 0.0
  %139 = vmatpush1.msra.mxu0 %v115
  %140 = vmatprep.subr.mxu0 0.0
  %141 = vmatpush1.msra.mxu0 %v116
  %142 = vmatprep.subr.mxu0 0.0
  %143 = vmatpush1.msra.mxu0 %v117
  %144 = vmatprep.subr.mxu0 0.0
  %145 = vmatpush1.msra.mxu0 %v118
  %146 = vmatprep.subr.mxu0 0.0
  %147 = vmatpush1.msra.mxu0 %v119
  %148 = vmatprep.subr.mxu0 0.0
  %149 = vmatpush1.msra.mxu0 %v120
  %150 = vmatprep.subr.mxu0 0.0
  %151 = vmatpush1.msra.mxu0 %v121
  %152 = vmatprep.subr.mxu0 0.0
  %153 = vmatpush1.msra.mxu0 %v122
  %154 = vmatprep.subr.mxu0 0.0
  %155 = vmatpush1.msra.mxu0 %v123
  %156 = vmatprep.subr.mxu0 0.0
  %157 = vmatpush1.msra.mxu0 %v124
  %158 = vmatprep.subr.mxu0 0.0
  %159 = vmatpush1.msra.mxu0 %v125
  %160 = vmatprep.subr.mxu0 0.0
  %161 = vmatpush1.msra.mxu0 %v126
  %162 = vmatprep.subr.mxu0 0.0
  %163 = vmatpush1.msra.mxu0 %v127
  %164 = vmatprep.subr.mxu0 0.0
  %165 = vmatpush1.msra.mxu0 %v128
  %166 = vmatprep.subr.mxu0 0.0
  %167 = vmatpush1.msra.mxu0 %v129
  %168 = vmatprep.subr.mxu0 0.0
  %169 = vmatpush1.msra.mxu0 %v130
  %170 = vmatprep.subr.mxu0 0.0
  %171 = vmatpush1.msra.mxu0 0.0
  %172 = vmatprep.subr.mxu0 0.0
  %173 = vmatpush1.msra.mxu0 0.0
  %174 = vmatprep.subr.mxu0 0.0
  %175 = vmatpush1.msra.mxu0 0.0
  %176 = vmatprep.subr.mxu0 0.0
  %177 = vmatpush1.msra.mxu0 0.0
  %178 = vmatprep.subr.mxu0 0.0
  %179 = vmatpush1.msra.mxu0 0.0
  %180 = vmatprep.subr.mxu0 0.0
  %181 = vmatpush1.msra.mxu0 0.0
  %182 = vmatprep.subr.mxu0 0.0
  %183 = vmatpush1.msra.mxu0 0.0
  %184 = vmatprep.subr.mxu0 0.0
  %185 = vmatpush1.msra.mxu0 0.0
  %186 = vmatprep.subr.mxu0 0.0
  %187 = vmatpush1.msra.mxu0 0.0
  %188 = vmatprep.subr.mxu0 0.0
  %189 = vmatpush1.msra.mxu0 0.0
  %190 = vmatprep.subr.mxu0 0.0
  %191 = vmatpush1.msra.mxu0 0.0
  %192 = vmatprep.subr.mxu0 0.0
  %193 = vmatpush1.msra.mxu0 0.0
  %194 = vmatprep.subr.mxu0 0.0
  %195 = vmatpush1.msra.mxu0 0.0
  %196 = vmatprep.subr.mxu0 0.0
  %197 = vmatpush1.msra.mxu0 0.0
  %198 = vmatprep.subr.mxu0 0.0
  %199 = vmatpush1.msra.mxu0 0.0
  %200 = vmatprep.subr.mxu0 0.0
  %201 = vmatpush1.msra.mxu0 0.0
  %202 = vmatprep.mubr.f32.mxu0 0.0
  %203 = vmatmul.mubr.f32.gmra.mrb[0].mxu0 %v114
  %v204 = vpop.f32.mrb[0].mxu0
  %v205 = vadd.f32 %v136, %v204
  %v206 = vpop.f32.mrb[0].mxu0
  %207 = vdwg.mxu0
  %v208 = vmax.f32 %v205, 0.0
  %209 = vst [vmem:[%s5] sm:$0xff] %v208
  // Predicated region
  $region22: #{glimpse_network_forward.1} parent=0 // pred_check
    _
  $region23: #{glimpse_network_forward.1} parent=0 // pred_check_branch
    %211 = sbr.rel (0) target = $region25
  $region24: #{glimpse_network_forward.1} parent=0 // pred_region
    _
  $region25: #{glimpse_network_forward.1} parent=0 // pred_fallthru
    _
  // Predicated region
  $region26: #{glimpse_network_forward.1} parent=0 // pred_check
    _
  $region27: #{glimpse_network_forward.1} parent=0 // pred_check_branch
    %213 = sbr.rel (0) target = $region29
  $region28: #{glimpse_network_forward.1} parent=0 // pred_region
    _
  $region29: #{glimpse_network_forward.1} parent=0 // pred_fallthru
    _

</llo_original>
